<compile_context>
chip_gen: v7x
topology: tpu7x:2x2x1
jax: 0.10.0
libtpu: 0.0.40
codegen_flags: <defaults>
</compile_context>

<pallas_src>
import math
import jax
import jax.numpy as jnp
from jax.experimental import pallas as pl
from jax.experimental.pallas import tpu as pltpu  # noqa: F401  (no TPU-specific params needed at this size)

# ---- config (mirrors __C) ----------------------------------------------------
HIDDEN_SIZE = 32
MULTI_HEAD = 4
HIDDEN_SIZE_HEAD = HIDDEN_SIZE // MULTI_HEAD   # 8
SEQ = 8
BATCH = 2
DROPOUT_R = 0.1  # TODO(synk): dropout is identity in eval mode; train-mode dropout not implemented.


def _mhatt_kernel(xq_ref, xk_ref, xv_ref, bias_ref, seg_ref, hmask_ref,
                  wqkv_ref, wm_ref, b_ref, out_ref):
    """Whole-batch, all-heads MHAtt forward in one step (no head loop).

    xq    : (BS, H)        bf16   queries, 1/sqrt(d_k) folded into Wq/bq
    xk/xv : (nh*BS, H)     bf16   key/value inputs tiled nh times along rows
    bias  : (BS, nh*BS)    f32    additive score bias (-1e9 cross-batch / masked keys)
    seg   : (nh*BS, nh*BS) f32    block-diagonal ones (per-head softmax segments)
    hmask : (nh*BS, H)     f32    per-head column selector (1 on own head's hd dims)
    wqkv  : (3, H, H)      bf16   q/k/v projection weights
    wm    : (H, H)         bf16   merge projection weights
    b     : (4, 1, H)      f32    q/k/v/merge biases
    out   : (BS, H)        f32
    """
    f32, bf16 = jnp.float32, jnp.bfloat16
    hmask = hmask_ref[...]

    # Projections (bf16 operands, f32 accumulation).  K/V are computed on the
    # nh-times replicated inputs and masked per head -> no lane sub-slicing.
    qp = (jnp.dot(xq_ref[...], wqkv_ref[0], preferred_element_type=f32)
          + b_ref[0]).astype(bf16)                                    # (BS, H)
    kp = ((jnp.dot(xk_ref[...], wqkv_ref[1], preferred_element_type=f32)
           + b_ref[1]) * hmask).astype(bf16)                          # (nh*BS, H)
    vp = (jnp.dot(xv_ref[...], wqkv_ref[2], preferred_element_type=f32)
          + b_ref[2]) * hmask                                         # (nh*BS, H) f32

    # All heads' scores in one MXU op: contract last dims (no K transpose).
    # Column index = h*BS + key, so the head-h block only sees head-h dims
    # because kp was zeroed outside its own head's columns.
    scores = jax.lax.dot_general(
        qp, kp, dimension_numbers=(((1,), (1,)), ((), ())),
        preferred_element_type=f32) + bias_ref[...]                   # (BS, nh*BS)

    # Stable exp; a single global row max is valid because normalization
    # below is per head block (the shared max cancels).
    m = jnp.max(scores, axis=-1, keepdims=True)
    e = jnp.exp(scores - m)                                           # (BS, nh*BS)

    # Per-head softmax denominators, broadcast to every column of their block
    # via one matmul with the block-diagonal segment matrix.
    denom = jnp.dot(e, seg_ref[...], preferred_element_type=f32)      # (BS, nh*BS)
    att = (e * pl.reciprocal(denom, approx=True)).astype(bf16)

    # Fused merge: vm row (h*BS + key) = v_h[key] @ Wm_h, so att @ vm is the
    # concatenated-heads merge projection (no concatenate, no head loop).
    vm = jnp.dot(vp.astype(bf16), wm_ref[...],
                 preferred_element_type=f32).astype(bf16)             # (nh*BS, H)
    out = jnp.dot(att, vm, preferred_element_type=f32) + b_ref[3]     # (BS, H)

    # TODO(synk): H=32 < 128 lanes -> masked partial store; acceptable at this size.
    out_ref[...] = out.astype(out_ref.dtype)


def mhatt_forward(v, k, q, mask, params):
    """v, k, q: (B, S, H) float32; mask: (B, 1, S) float32 (1.0 = masked)."""
    B, S, H = q.shape
    BS = B * S
    nh, hd = MULTI_HEAD, HIDDEN_SIZE_HEAD
    wq, bq, wk, bk, wv, bv, wm, bm = params

    scale = 1.0 / math.sqrt(hd)
    # Fold the 1/sqrt(d_k) attention scale into the Q projection.
    wqkv = jnp.stack([wq * scale, wk, wv]).astype(jnp.bfloat16)        # (3, H, H)
    wm_b = wm.astype(jnp.bfloat16)                                     # (H, H)
    b_all = jnp.stack([bq * scale, bk, bv, bm]).astype(jnp.float32)    # (4, 1, H)

    xq = q.reshape(BS, H).astype(jnp.bfloat16)                         # (BS, H)
    xk = jnp.tile(k.reshape(BS, H), (nh, 1)).astype(jnp.bfloat16)      # (nh*BS, H)
    xv = jnp.tile(v.reshape(BS, H), (nh, 1)).astype(jnp.bfloat16)      # (nh*BS, H)

    # Per-head column selector: row h*BS+key keeps only head h's hd columns.
    hmask = jnp.repeat(
        jnp.repeat(jnp.eye(nh, dtype=jnp.float32), hd, axis=1),
        BS, axis=0)                                                    # (nh*BS, H)

    # Block-diagonal segment matrix for per-head softmax denominators.
    seg = jnp.kron(jnp.eye(nh, dtype=jnp.float32),
                   jnp.ones((BS, BS), jnp.float32))                    # (nh*BS, nh*BS)

    # Additive attention bias over the flattened score matrix: -1e9 for
    # cross-batch (query, key) pairs and masked key positions, tiled per head.
    batch_id = jnp.repeat(jnp.arange(B), S)                            # (BS,)
    cross = batch_id[:, None] != batch_id[None, :]                     # (BS, BS)
    key_masked = mask.reshape(BS) > 0.5                                # (BS,)
    bias_bs = jnp.where(cross | key_masked[None, :],
                        jnp.float32(-1e9), jnp.float32(0.0))           # (BS, BS)
    bias = jnp.tile(bias_bs, (1, nh))                                  # (BS, nh*BS)

    out = pl.pallas_call(
        _mhatt_kernel,
        out_shape=jax.ShapeDtypeStruct((BS, H), jnp.float32),
    )(xq, xk, xv, bias, seg, hmask, wqkv, wm_b, b_all)
    return out.reshape(B, S, H)


def _xavier(key, fan_in, fan_out):
    limit = math.sqrt(6.0 / (fan_in + fan_out))
    return jax.random.uniform(key, (fan_in, fan_out), jnp.float32, -limit, limit)


def _reference(v, k, q, mask, params):
    """Pure-JAX f32 reference matching the PyTorch forward (eval mode)."""
    wq, bq, wk, bk, wv, bv, wm, bm = params
    B, S, H = q.shape
    nh, hd = MULTI_HEAD, HIDDEN_SIZE_HEAD

    def proj(x, w, b):
        y = x @ w + b                                           # (B, S, H)
        return y.reshape(B, S, nh, hd).transpose(0, 2, 1, 3)    # (B, nh, S, hd)

    qp, kp, vp = proj(q, wq, bq), proj(k, wk, bk), proj(v, wv, bv)
    scores = jnp.einsum('bhqd,bhkd->bhqk', qp, kp) / math.sqrt(hd)
    scores = jnp.where(mask[:, None, :, :] > 0.5, -1e9, scores)
    att = jax.nn.softmax(scores, axis=-1)
    out = jnp.einsum('bhqk,bhkd->bhqd', att, vp)
    out = out.transpose(0, 2, 1, 3).reshape(B, S, H)
    return out @ wm + bm


if __name__ == "__main__":
    key = jax.random.PRNGKey(0)
    keys = jax.random.split(key, 12)

    # Deterministic parameter init (xavier-uniform weights, zero biases),
    # stored already transposed so y = x @ W + b.
    wq = _xavier(keys[0], HIDDEN_SIZE, HIDDEN_SIZE)
    wk = _xavier(keys[1], HIDDEN_SIZE, HIDDEN_SIZE)
    wv = _xavier(keys[2], HIDDEN_SIZE, HIDDEN_SIZE)
    wm = _xavier(keys[3], HIDDEN_SIZE, HIDDEN_SIZE)
    bq = jnp.zeros((1, HIDDEN_SIZE), jnp.float32)
    bk = jnp.zeros((1, HIDDEN_SIZE), jnp.float32)
    bv = jnp.zeros((1, HIDDEN_SIZE), jnp.float32)
    bm = jnp.zeros((1, HIDDEN_SIZE), jnp.float32)
    params = (wq, bq, wk, bk, wv, bv, wm, bm)

    q = jax.random.normal(keys[4], (BATCH, SEQ, HIDDEN_SIZE), jnp.float32)
    k = jax.random.normal(keys[5], (BATCH, SEQ, HIDDEN_SIZE), jnp.float32)
    v = jax.random.normal(keys[6], (BATCH, SEQ, HIDDEN_SIZE), jnp.float32)
    # Mask out the last two key positions of batch element 1 (1.0 == masked).
    mask = jnp.zeros((BATCH, 1, SEQ), jnp.float32)
    mask = mask.at[1, 0, SEQ - 2:].set(1.0)

    out = mhatt_forward(v, k, q, mask, params)
    out = jax.block_until_ready(out)

    ref = _reference(v, k, q, mask, params)
    # Kernel runs matmuls in bf16 (f32 accumulation) + approx reciprocal;
    # compare against the exact f32 module semantics with a bf16-level tolerance.
    assert jnp.allclose(out, ref, atol=5e-2, rtol=5e-2), "mismatch vs. JAX reference"

    print("KERNEL_OK")
</pallas_src>

<mosaic_0001>
module attributes {stable_mosaic.version = 11 : i64} {
  func.func @_mhatt_kernel(%arg0: memref<16x32xbf16, #tpu.memory_space<vmem>>, %arg1: memref<64x32xbf16, #tpu.memory_space<vmem>>, %arg2: memref<64x32xbf16, #tpu.memory_space<vmem>>, %arg3: memref<16x64xf32, #tpu.memory_space<vmem>>, %arg4: memref<64x64xf32, #tpu.memory_space<vmem>>, %arg5: memref<64x32xf32, #tpu.memory_space<vmem>>, %arg6: memref<3x32x32xbf16, #tpu.memory_space<vmem>>, %arg7: memref<32x32xbf16, #tpu.memory_space<vmem>>, %arg8: memref<4x1x32xf32, #tpu.memory_space<vmem>>, %arg9: memref<16x32xf32, #tpu.memory_space<vmem>>) attributes {dimension_semantics = [], scalar_prefetch = 0 : i64, scratch_operands = 0 : i64, tpu.core_type = #tpu.core_type<tc>} {
    %c0 = arith.constant 0 : index
    %c0_0 = arith.constant 0 : index
    %0 = vector.load %arg5[%c0, %c0_0] : memref<64x32xf32, #tpu.memory_space<vmem>>, vector<64x32xf32>
    %c0_1 = arith.constant 0 : index
    %c0_2 = arith.constant 0 : index
    %1 = vector.load %arg0[%c0_1, %c0_2] : memref<16x32xbf16, #tpu.memory_space<vmem>>, vector<16x32xbf16>
    %c0_3 = arith.constant 0 : index
    %c0_4 = arith.constant 0 : index
    %c0_5 = arith.constant 0 : index
    %2 = vector.load %arg6[%c0_3, %c0_4, %c0_5] : memref<3x32x32xbf16, #tpu.memory_space<vmem>>, vector<1x32x32xbf16>
    %3 = vector.shape_cast %2 : vector<1x32x32xbf16> to vector<32x32xbf16>
    %cst = arith.constant dense<0.000000e+00> : vector<16x32xf32>
    %4 = tpu.matmul %1, %3, %cst {dimension_numbers = #tpu.dot_dimension_numbers<[1], [0], [0], [1], [0, 0, 1, 1], [], []>} : vector<16x32xbf16>, vector<32x32xbf16>, vector<16x32xf32> -> vector<16x32xf32>
    %c0_6 = arith.constant 0 : index
    %c0_7 = arith.constant 0 : index
    %c0_8 = arith.constant 0 : index
    %5 = vector.load %arg8[%c0_6, %c0_7, %c0_8] : memref<4x1x32xf32, #tpu.memory_space<vmem>>, vector<1x1x32xf32>
    %6 = vector.shape_cast %5 : vector<1x1x32xf32> to vector<1x32xf32>
    %7 = vector.broadcast %6 : vector<1x32xf32> to vector<16x32xf32>
    %8 = arith.addf %4, %7 : vector<16x32xf32>
    %9 = arith.truncf %8 : vector<16x32xf32> to vector<16x32xbf16>
    %c0_9 = arith.constant 0 : index
    %c0_10 = arith.constant 0 : index
    %10 = vector.load %arg1[%c0_9, %c0_10] : memref<64x32xbf16, #tpu.memory_space<vmem>>, vector<64x32xbf16>
    %c1 = arith.constant 1 : index
    %c0_11 = arith.constant 0 : index
    %c0_12 = arith.constant 0 : index
    %11 = vector.load %arg6[%c1, %c0_11, %c0_12] : memref<3x32x32xbf16, #tpu.memory_space<vmem>>, vector<1x32x32xbf16>
    %12 = vector.shape_cast %11 : vector<1x32x32xbf16> to vector<32x32xbf16>
    %cst_13 = arith.constant dense<0.000000e+00> : vector<64x32xf32>
    %13 = tpu.matmul %10, %12, %cst_13 {dimension_numbers = #tpu.dot_dimension_numbers<[1], [0], [0], [1], [0, 0, 1, 1], [], []>} : vector<64x32xbf16>, vector<32x32xbf16>, vector<64x32xf32> -> vector<64x32xf32>
    %c1_14 = arith.constant 1 : index
    %c0_15 = arith.constant 0 : index
    %c0_16 = arith.constant 0 : index
    %14 = vector.load %arg8[%c1_14, %c0_15, %c0_16] : memref<4x1x32xf32, #tpu.memory_space<vmem>>, vector<1x1x32xf32>
    %15 = vector.shape_cast %14 : vector<1x1x32xf32> to vector<1x32xf32>
    %16 = vector.broadcast %15 : vector<1x32xf32> to vector<64x32xf32>
    %17 = arith.addf %13, %16 : vector<64x32xf32>
    %18 = arith.mulf %17, %0 : vector<64x32xf32>
    %19 = arith.truncf %18 : vector<64x32xf32> to vector<64x32xbf16>
    %c0_17 = arith.constant 0 : index
    %c0_18 = arith.constant 0 : index
    %20 = vector.load %arg2[%c0_17, %c0_18] : memref<64x32xbf16, #tpu.memory_space<vmem>>, vector<64x32xbf16>
    %c2 = arith.constant 2 : index
    %c0_19 = arith.constant 0 : index
    %c0_20 = arith.constant 0 : index
    %21 = vector.load %arg6[%c2, %c0_19, %c0_20] : memref<3x32x32xbf16, #tpu.memory_space<vmem>>, vector<1x32x32xbf16>
    %22 = vector.shape_cast %21 : vector<1x32x32xbf16> to vector<32x32xbf16>
    %cst_21 = arith.constant dense<0.000000e+00> : vector<64x32xf32>
    %23 = tpu.matmul %20, %22, %cst_21 {dimension_numbers = #tpu.dot_dimension_numbers<[1], [0], [0], [1], [0, 0, 1, 1], [], []>} : vector<64x32xbf16>, vector<32x32xbf16>, vector<64x32xf32> -> vector<64x32xf32>
    %c2_22 = arith.constant 2 : index
    %c0_23 = arith.constant 0 : index
    %c0_24 = arith.constant 0 : index
    %24 = vector.load %arg8[%c2_22, %c0_23, %c0_24] : memref<4x1x32xf32, #tpu.memory_space<vmem>>, vector<1x1x32xf32>
    %25 = vector.shape_cast %24 : vector<1x1x32xf32> to vector<1x32xf32>
    %26 = vector.broadcast %25 : vector<1x32xf32> to vector<64x32xf32>
    %27 = arith.addf %23, %26 : vector<64x32xf32>
    %28 = arith.mulf %27, %0 : vector<64x32xf32>
    %cst_25 = arith.constant dense<0.000000e+00> : vector<16x64xf32>
    %29 = tpu.matmul %9, %19, %cst_25 {dimension_numbers = #tpu.dot_dimension_numbers<[1], [1], [0], [0], [0, 0, 1, 0], [], []>} : vector<16x32xbf16>, vector<64x32xbf16>, vector<16x64xf32> -> vector<16x64xf32>
    %c0_26 = arith.constant 0 : index
    %c0_27 = arith.constant 0 : index
    %30 = vector.load %arg3[%c0_26, %c0_27] : memref<16x64xf32, #tpu.memory_space<vmem>>, vector<16x64xf32>
    %31 = arith.addf %29, %30 : vector<16x64xf32>
    %cst_28 = arith.constant dense<0xFF800000> : vector<16xf32>
    %32 = vector.multi_reduction <maximumf>, %31, %cst_28 [1] : vector<16x64xf32> to vector<16xf32>
    %33 = vector.shape_cast %32 : vector<16xf32> to vector<16x1xf32>
    %34 = vector.broadcast %33 : vector<16x1xf32> to vector<16x64xf32>
    %35 = arith.subf %31, %34 : vector<16x64xf32>
    %36 = math.exp %35 : vector<16x64xf32>
    %c0_29 = arith.constant 0 : index
    %c0_30 = arith.constant 0 : index
    %37 = vector.load %arg4[%c0_29, %c0_30] : memref<64x64xf32, #tpu.memory_space<vmem>>, vector<64x64xf32>
    %cst_31 = arith.constant dense<0.000000e+00> : vector<16x64xf32>
    %38 = tpu.matmul %36, %37, %cst_31 {dimension_numbers = #tpu.dot_dimension_numbers<[1], [0], [0], [1], [0, 0, 1, 1], [], []>} : vector<16x64xf32>, vector<64x64xf32>, vector<16x64xf32> -> vector<16x64xf32>
    %39 = tpu.reciprocal %38 {approx = true} : vector<16x64xf32> -> vector<16x64xf32>
    %40 = arith.mulf %36, %39 : vector<16x64xf32>
    %41 = arith.truncf %40 : vector<16x64xf32> to vector<16x64xbf16>
    %42 = arith.truncf %28 : vector<64x32xf32> to vector<64x32xbf16>
    %c0_32 = arith.constant 0 : index
    %c0_33 = arith.constant 0 : index
    %43 = vector.load %arg7[%c0_32, %c0_33] : memref<32x32xbf16, #tpu.memory_space<vmem>>, vector<32x32xbf16>
    %cst_34 = arith.constant dense<0.000000e+00> : vector<64x32xf32>
    %44 = tpu.matmul %42, %43, %cst_34 {dimension_numbers = #tpu.dot_dimension_numbers<[1], [0], [0], [1], [0, 0, 1, 1], [], []>} : vector<64x32xbf16>, vector<32x32xbf16>, vector<64x32xf32> -> vector<64x32xf32>
    %45 = arith.truncf %44 : vector<64x32xf32> to vector<64x32xbf16>
    %cst_35 = arith.constant dense<0.000000e+00> : vector<16x32xf32>
    %46 = tpu.matmul %41, %45, %cst_35 {dimension_numbers = #tpu.dot_dimension_numbers<[1], [0], [0], [1], [0, 0, 1, 1], [], []>} : vector<16x64xbf16>, vector<64x32xbf16>, vector<16x32xf32> -> vector<16x32xf32>
    %c3 = arith.constant 3 : index
    %c0_36 = arith.constant 0 : index
    %c0_37 = arith.constant 0 : index
    %47 = vector.load %arg8[%c3, %c0_36, %c0_37] : memref<4x1x32xf32, #tpu.memory_space<vmem>>, vector<1x1x32xf32>
    %48 = vector.shape_cast %47 : vector<1x1x32xf32> to vector<1x32xf32>
    %49 = vector.broadcast %48 : vector<1x32xf32> to vector<16x32xf32>
    %50 = arith.addf %46, %49 : vector<16x32xf32>
    %c0_38 = arith.constant 0 : index
    %c0_39 = arith.constant 0 : index
    %51 = vector.load %arg9[%c0_38, %c0_39] : memref<16x32xf32, #tpu.memory_space<vmem>>, vector<16x32xf32>
    tpu.vector_store %arg9[%c0_38, %c0_39], %50 {strides = array<i32>} : memref<16x32xf32, #tpu.memory_space<vmem>>, vector<16x32xf32>,
    return
  }
}

</mosaic_0001>

<llo_original>
// kernel: tpu_custom_call.1
$region0: #{tpu_custom_call.1}
  #allocation0 [shape = 'u32[]', space=smem, size = 0x4, offset = 0x4, fixed_abs, tag = 'smem constant byte address 0x4 - core index']
  #allocation1 [shape = 'u32[144,128]{1,0:T(1,128)}', space=vmem, size = 0x12000, scoped, tag = 'internal scratch']
  %s0 = inlined_call_operand.hbm [shape: bf16[16,32], index: 0, kind: input, shape index: {}]
  %s1 = inlined_call_operand.vmem [shape: bf16[64,32], index: 1, kind: input, shape index: {}]
  %s2 = inlined_call_operand.vmem [shape: bf16[64,32], index: 2, kind: input, shape index: {}]
  %s3 = inlined_call_operand.vmem [shape: f32[16,64], index: 3, kind: input, shape index: {}]
  %s4 = inlined_call_operand.vmem [shape: f32[64,64], index: 4, kind: input, shape index: {}]
  %s5 = inlined_call_operand.vmem [shape: f32[64,32], index: 5, kind: input, shape index: {}]
  %s6 = inlined_call_operand.vmem [shape: bf16[3,32,32], index: 6, kind: input, shape index: {}]
  %s7 = inlined_call_operand.vmem [shape: bf16[32,32], index: 7, kind: input, shape index: {}]
  %s8 = inlined_call_operand.vmem [shape: f32[4,1,32], index: 8, kind: input, shape index: {}]
  %s9 = inlined_call_operand.hbm [shape: f32[16,32], index: 9, kind: output, shape index: {}]
  %s10 = sld [smem:[#allocation0]]
  $region50: #{tpu_custom_call.1} parent=0
    _
  %s12 = ssub.s32 1, %s10
  %s13 = scalar_select 0, %s12, %s10
  $region1: #{tpu_custom_call.1} parent=0
    #allocation2 [shape = 'u8[4096]{0}', space=vmem, size = 0x1000, scoped, tag = 'input window, operand 0, single buffered']
    #allocation3 [shape = 's32[1]{0}', space=sflag, size = 0x4, scoped, tag = 'scoped memory for tpu_custom_call.1']
    #allocation4 [shape = 's32[1]{0}', space=sflag, size = 0x4, scoped, tag = 'scoped memory for tpu_custom_call.1']
    #allocation5 [shape = 'u8[8192]{0}', space=vmem, size = 0x2000, scoped, tag = 'output window, operand 0, single buffered']
    %14 = vsyncpa [#allocation3], 0
    %15 = vsyncpa [#allocation4], 0
    // Predicated region
    $region2: #{tpu_custom_call.1} parent=1 // pred_check
      _
    $region3: #{tpu_custom_call.1} parent=1 // pred_check_branch
      %17 = sbr.rel (0) target = $region5
    $region4: #{tpu_custom_call.1} parent=1 // pred_region
      %s19 = ssub.s32 128, 128
      %20 = vsyncadd [#allocation3], %s19
      %s21 = sshll.u32 [#allocation2], 4
      %s22 = int_to_ptr.vmem [resolvable:$true] %s21
      %27 = dma.hbm_to_vmem [thread:$0]  %s0, 128, %s22, [#allocation3], 64, 64, 4
    $region5: #{tpu_custom_call.1} parent=1 // pred_fallthru
      _
    // Predicated region
    $region6: #{tpu_custom_call.1} parent=1 // pred_check
      _
    $region7: #{tpu_custom_call.1} parent=1 // pred_check_branch
      %29 = sbr.rel (0) target = $region9
    $region8: #{tpu_custom_call.1} parent=1 // pred_region
      _
    $region9: #{tpu_custom_call.1} parent=1 // pred_fallthru
      _
    // Predicated region
    $region10: #{tpu_custom_call.1} parent=1 // pred_check
      _
    $region11: #{tpu_custom_call.1} parent=1 // pred_check_branch
      %31 = sbr.rel (0) target = $region13
    $region12: #{tpu_custom_call.1} parent=1 // pred_region
      _
    $region13: #{tpu_custom_call.1} parent=1 // pred_fallthru
      _
    // Predicated region
    $region14: #{tpu_custom_call.1} parent=1 // pred_check
      _
    $region15: #{tpu_custom_call.1} parent=1 // pred_check_branch
      %33 = sbr.rel (0) target = $region17
    $region16: #{tpu_custom_call.1} parent=1 // pred_region
      _
    $region17: #{tpu_custom_call.1} parent=1 // pred_fallthru
      _
    // Predicated region
    $region18: #{tpu_custom_call.1} parent=1 // pred_check
      _
    $region19: #{tpu_custom_call.1} parent=1 // pred_check_branch
      %35 = sbr.rel (0) target = $region21
    $region20: #{tpu_custom_call.1} parent=1 // pred_region
      _
    $region21: #{tpu_custom_call.1} parent=1 // pred_fallthru
      _
    // Predicated region
    $region22: #{tpu_custom_call.1} parent=1 // pred_check
      _
    $region23: #{tpu_custom_call.1} parent=1 // pred_check_branch
      %37 = sbr.rel (0) target = $region25
    $region24: #{tpu_custom_call.1} parent=1 // pred_region
      _
    $region25: #{tpu_custom_call.1} parent=1 // pred_fallthru
      _
    // Predicated region
    $region26: #{tpu_custom_call.1} parent=1 // pred_check
      _
    $region27: #{tpu_custom_call.1} parent=1 // pred_check_branch
      %39 = sbr.rel (0) target = $region29
    $region28: #{tpu_custom_call.1} parent=1 // pred_region
      _
    $region29: #{tpu_custom_call.1} parent=1 // pred_fallthru
      _
    // Predicated region
    $region30: #{tpu_custom_call.1} parent=1 // pred_check
      _
    $region31: #{tpu_custom_call.1} parent=1 // pred_check_branch
      %41 = sbr.rel (0) target = $region33
    $region32: #{tpu_custom_call.1} parent=1 // pred_region
      _
    $region33: #{tpu_custom_call.1} parent=1 // pred_fallthru
      _
    // Predicated region
    $region34: #{tpu_custom_call.1} parent=1 // pred_check
      _
    $region35: #{tpu_custom_call.1} parent=1 // pred_check_branch
      %43 = sbr.rel (0) target = $region37
    $region36: #{tpu_custom_call.1} parent=1 // pred_region
      _
    $region37: #{tpu_custom_call.1} parent=1 // pred_fallthru
      _
    // Predicated region
    $region38: #{tpu_custom_call.1} parent=1 // pred_check
      _
    $region39: #{tpu_custom_call.1} parent=1 // pred_check_branch
      %45 = sbr.rel (0) target = $region41
    $region40: #{tpu_custom_call.1} parent=1 // pred_region
      %46 = dma.done [#allocation3], 128
    $region41: #{tpu_custom_call.1} parent=1 // pred_fallthru
      _
    %v48 = vld [vmem:[%s5] sm:$0xff]
    %v49 = vld [vmem:[%s5 + $0x8] sm:$0xff]
    %v50 = vld [vmem:[%s5 + $0x10] sm:$0xff]
    %v51 = vld [vmem:[%s5 + $0x18] sm:$0xff]
    %v52 = vld [vmem:[%s5 + $0x20] sm:$0xff]
    %v53 = vld [vmem:[%s5 + $0x28] sm:$0xff]
    %v54 = vld [vmem:[%s5 + $0x30] sm:$0xff]
    %v55 = vld [vmem:[%s5 + $0x38] sm:$0xff]
    %v56 = vld [vmem:[#allocation2] sm:$0xf]
    %v57 = vld [vmem:[#allocation2 + $0x4] sm:$0xf]
    %v58 = vld [vmem:[%s6] sm:$0xf]
    %v59 = vld [vmem:[%s6 + $0x4] sm:$0xf]
    %v60 = vld [vmem:[%s6 + $0x8] sm:$0xf]
    %v61 = vld [vmem:[%s6 + $0xc] sm:$0xf]
    %v62 = vld [vmem:[%s8] sm:$0x1]
    %v64 = vlaneseq
    %v65 = vshrl.u32 %v64, 7
    %v66 = vsub.s32 0, %v65
    %v67 = vrot.slane %v62, %v66
    %v71 = vunpack.c.l.b16 %v56
    %v72 = vunpack.c.l.b16 %v57
    %v73 = vpack.c.b16 %v72, %v71
    %v78 = vunpack.c.l.b16 %v58
    %v79 = vunpack.c.l.b16 %v59
    %v80 = vunpack.c.l.b16 %v60
    %v81 = vunpack.c.l.b16 %v61
    %v82 = vpack.c.b16 %v79, %v78
    %v83 = vpack.c.b16 %v81, %v80
    %vm86 = vcmask 261120
    %v88 = vsel %vm86, %v73, 0
    %90 = vmatprep.subr.bf16.mxu0 0
    %91 = vmatpush1.bf16.msra.mxu0 %v82
    %92 = vmatprep.subr.bf16.mxu0 0
    %93 = vmatpush1.bf16.msra.mxu0 %v83
    %94 = vmatprep.subr.bf16.mxu0 0
    %95 = vmatpush1.bf16.msra.mxu0 0
    %96 = vmatprep.subr.bf16.mxu0 0
    %97 = vmatpush1.bf16.msra.mxu0 0
    %98 = vmatprep.subr.bf16.mxu0 0
    %99 = vmatpush1.bf16.msra.mxu0 0
    %100 = vmatprep.subr.bf16.mxu0 0
    %101 = vmatpush1.bf16.msra.mxu0 0
    %102 = vmatprep.subr.bf16.mxu0 0
    %103 = vmatpush1.bf16.msra.mxu0 0
    %104 = vmatprep.subr.bf16.mxu0 0
    %105 = vmatpush1.bf16.msra.mxu0 0
    %106 = vmatprep.subr.bf16.mxu0 0
    %107 = vmatpush1.bf16.msra.mxu0 0
    %108 = vmatprep.subr.bf16.mxu0 0
    %109 = vmatpush1.bf16.msra.mxu0 0
    %110 = vmatprep.subr.bf16.mxu0 0
    %111 = vmatpush1.bf16.msra.mxu0 0
    %112 = vmatprep.subr.bf16.mxu0 0
    %113 = vmatpush1.bf16.msra.mxu0 0
    %114 = vmatprep.subr.bf16.mxu0 0
    %115 = vmatpush1.bf16.msra.mxu0 0
    %116 = vmatprep.subr.bf16.mxu0 0
    %117 = vmatpush1.bf16.msra.mxu0 0
    %118 = vmatprep.subr.bf16.mxu0 0
    %119 = vmatpush1.bf16.msra.mxu0 0
    %120 = vmatprep.subr.bf16.mxu0 0
    %121 = vmatpush1.bf16.msra.mxu0 0
    %122 = vmatprep.mubr.bf16.mxu0 0
    %123 = vmatmul.mubr.bf16.gmra.mrb[0].mxu0 %v88
    %v124 = vpop.f32.mrb[0].mxu0
    %v125 = vadd.f32 %v67, %v124
    %v126 = vpop.f32.mrb[0].mxu0
    %v127 = vpop.f32.mrb[0].mxu0
    %v128 = vadd.f32 %v67, %v127
    %v129 = vpop.f32.mrb[0].mxu0
    %130 = vdwg.mxu0
    %v131 = vpack.c.bf16 %v128, %v125
    %v132 = vld [vmem:[%s1] sm:$0xf]
    %v133 = vld [vmem:[%s1 + $0x4] sm:$0xf]
    %v134 = vld [vmem:[%s1 + $0x8] sm:$0xf]
    %v135 = vld [vmem:[%s1 + $0xc] sm:$0xf]
    %v136 = vld [vmem:[%s1 + $0x10] sm:$0xf]
    %v137 = vld [vmem:[%s1 + $0x14] sm:$0xf]
    %v138 = vld [vmem:[%s1 + $0x18] sm:$0xf]
    %v139 = vld [vmem:[%s1 + $0x1c] sm:$0xf]
    %s140 = scalar_lea.vmem %s6, 16
    %v141 = vld [vmem:[%s140] sm:$0xf]
    %v142 = vld [vmem:[%s140 + $0x4] sm:$0xf]
    %v143 = vld [vmem:[%s140 + $0x8] sm:$0xf]
    %v144 = vld [vmem:[%s140 + $0xc] sm:$0xf]
    %s145 = scalar_lea.vmem %s8, 1
    %v146 = vld [vmem:[%s145] sm:$0x1]
    %v148 = vlaneseq
    %v149 = vshrl.u32 %v148, 7
    %v150 = vsub.s32 0, %v149
    %v151 = vrot.slane %v146, %v150
    %v161 = vunpack.c.l.b16 %v132
    %v162 = vunpack.c.l.b16 %v133
    %v163 = vunpack.c.l.b16 %v134
    %v164 = vunpack.c.l.b16 %v135
    %v165 = vunpack.c.l.b16 %v136
    %v166 = vunpack.c.l.b16 %v137
    %v167 = vunpack.c.l.b16 %v138
    %v168 = vunpack.c.l.b16 %v139
    %v169 = vpack.c.b16 %v162, %v161
    %v170 = vpack.c.b16 %v164, %v163
    %v171 = vpack.c.b16 %v166, %v165
    %v172 = vpack.c.b16 %v168, %v167
    %v177 = vunpack.c.l.b16 %v141
    %v178 = vunpack.c.l.b16 %v142
    %v179 = vunpack.c.l.b16 %v143
    %v180 = vunpack.c.l.b16 %v144
    %v181 = vpack.c.b16 %v178, %v177
    %v182 = vpack.c.b16 %v180, %v179
    %v186 = vsel %vm86, %v169, 0
    %v189 = vsel %vm86, %v170, 0
    %v192 = vsel %vm86, %v171, 0
    %v195 = vsel %vm86, %v172, 0
    %197 = vmatprep.subr.bf16.mxu0 0
    %198 = vmatpush1.bf16.msra.mxu0 %v181
    %199 = vmatprep.subr.bf16.mxu0 0
    %200 = vmatpush1.bf16.msra.mxu0 %v182
    %201 = vmatprep.subr.bf16.mxu0 0
    %202 = vmatpush1.bf16.msra.mxu0 0
    %203 = vmatprep.subr.bf16.mxu0 0
    %204 = vmatpush1.bf16.msra.mxu0 0
    %205 = vmatprep.subr.bf16.mxu0 0
    %206 = vmatpush1.bf16.msra.mxu0 0
    %207 = vmatprep.subr.bf16.mxu0 0
    %208 = vmatpush1.bf16.msra.mxu0 0
    %209 = vmatprep.subr.bf16.mxu0 0
    %210 = vmatpush1.bf16.msra.mxu0 0
    %211 = vmatprep.subr.bf16.mxu0 0
    %212 = vmatpush1.bf16.msra.mxu0 0
    %213 = vmatprep.subr.bf16.mxu0 0
    %214 = vmatpush1.bf16.msra.mxu0 0
    %215 = vmatprep.subr.bf16.mxu0 0
    %216 = vmatpush1.bf16.msra.mxu0 0
    %217 = vmatprep.subr.bf16.mxu0 0
    %218 = vmatpush1.bf16.msra.mxu0 0
    %219 = vmatprep.subr.bf16.mxu0 0
    %220 = vmatpush1.bf16.msra.mxu0 0
    %221 = vmatprep.subr.bf16.mxu0 0
    %222 = vmatpush1.bf16.msra.mxu0 0
    %223 = vmatprep.subr.bf16.mxu0 0
    %224 = vmatpush1.bf16.msra.mxu0 0
    %225 = vmatprep.subr.bf16.mxu0 0
    %226 = vmatpush1.bf16.msra.mxu0 0
    %227 = vmatprep.subr.bf16.mxu0 0
    %228 = vmatpush1.bf16.msra.mxu0 0
    %229 = vmatprep.mubr.bf16.mxu0 0
    %230 = vmatmul.mubr.bf16.gmra.mrb[0].mxu0 %v186
    %v231 = vpop.f32.mrb[0].mxu0
    %v232 = vadd.f32 %v151, %v231
    %v233 = vpop.f32.mrb[0].mxu0
    %v234 = vpop.f32.mrb[0].mxu0
    %v235 = vadd.f32 %v151, %v234
    %v236 = vpop.f32.mrb[0].mxu0
    %237 = vmatprep.mubr.bf16.mxu0 0
    %238 = vmatmul.mubr.bf16.gmra.mrb[0].mxu0 %v189
    %v239 = vpop.f32.mrb[0].mxu0
    %v240 = vadd.f32 %v151, %v239
    %v241 = vpop.f32.mrb[0].mxu0
    %v242 = vpop.f32.mrb[0].mxu0
    %v243 = vadd.f32 %v151, %v242
    %v244 = vpop.f32.mrb[0].mxu0
    %245 = vmatprep.mubr.bf16.mxu0 0
    %246 = vmatmul.mubr.bf16.gmra.mrb[0].mxu0 %v192
    %v247 = vpop.f32.mrb[0].mxu0
    %v248 = vadd.f32 %v151, %v247
    %v249 = vpop.f32.mrb[0].mxu0
    %v250 = vpop.f32.mrb[0].mxu0
    %v251 = vadd.f32 %v151, %v250
    %v252 = vpop.f32.mrb[0].mxu0
    %253 = vmatprep.mubr.bf16.mxu0 0
    %254 = vmatmul.mubr.bf16.gmra.mrb[0].mxu0 %v195
    %v255 = vpop.f32.mrb[0].mxu0
    %v256 = vadd.f32 %v151, %v255
    %v257 = vpop.f32.mrb[0].mxu0
    %v258 = vpop.f32.mrb[0].mxu0
    %v259 = vadd.f32 %v151, %v258
    %v260 = vpop.f32.mrb[0].mxu0
    %261 = vdwg.mxu0
    %v262 = vmul.f32 %v232, %v48
    %v263 = vmul.f32 %v235, %v49
    %v264 = vmul.f32 %v240, %v50
    %v265 = vmul.f32 %v243, %v51
    %v266 = vmul.f32 %v248, %v52
    %v267 = vmul.f32 %v251, %v53
    %v268 = vmul.f32 %v256, %v54
    %v269 = vmul.f32 %v259, %v55
    %v270 = vpack.c.bf16 %v263, %v262
    %v271 = vpack.c.bf16 %v265, %v264
    %v272 = vpack.c.bf16 %v267, %v266
    %v273 = vpack.c.bf16 %v269, %v268
    %v274 = vld [vmem:[%s2] sm:$0xf]
    %v275 = vld [vmem:[%s2 + $0x4] sm:$0xf]
    %v276 = vld [vmem:[%s2 + $0x8] sm:$0xf]
    %v277 = vld [vmem:[%s2 + $0xc] sm:$0xf]
    %v278 = vld [vmem:[%s2 + $0x10] sm:$0xf]
    %v279 = vld [vmem:[%s2 + $0x14] sm:$0xf]
    %v280 = vld [vmem:[%s2 + $0x18] sm:$0xf]
    %v281 = vld [vmem:[%s2 + $0x1c] sm:$0xf]
    %s282 = scalar_lea.vmem %s6, 32
    %v283 = vld [vmem:[%s282] sm:$0xf]
    %v284 = vld [vmem:[%s282 + $0x4] sm:$0xf]
    %v285 = vld [vmem:[%s282 + $0x8] sm:$0xf]
    %v286 = vld [vmem:[%s282 + $0xc] sm:$0xf]
    %s287 = scalar_lea.vmem %s8, 2
    %v288 = vld [vmem:[%s287] sm:$0x1]
    %v290 = vlaneseq
    %v291 = vshrl.u32 %v290, 7
    %v292 = vsub.s32 0, %v291
    %v293 = vrot.slane %v288, %v292
    %v303 = vunpack.c.l.b16 %v274
    %v304 = vunpack.c.l.b16 %v275
    %v305 = vunpack.c.l.b16 %v276
    %v306 = vunpack.c.l.b16 %v277
    %v307 = vunpack.c.l.b16 %v278
    %v308 = vunpack.c.l.b16 %v279
    %v309 = vunpack.c.l.b16 %v280
    %v310 = vunpack.c.l.b16 %v281
    %v311 = vpack.c.b16 %v304, %v303
    %v312 = vpack.c.b16 %v306, %v305
    %v313 = vpack.c.b16 %v308, %v307
    %v314 = vpack.c.b16 %v310, %v309
    %v319 = vunpack.c.l.b16 %v283
    %v320 = vunpack.c.l.b16 %v284
    %v321 = vunpack.c.l.b16 %v285
    %v322 = vunpack.c.l.b16 %v286
    %v323 = vpack.c.b16 %v320, %v319
    %v324 = vpack.c.b16 %v322, %v321
    %v328 = vsel %vm86, %v311, 0
    %v331 = vsel %vm86, %v312, 0
    %v334 = vsel %vm86, %v313, 0
    %v337 = vsel %vm86, %v314, 0
    %339 = vmatprep.subr.bf16.mxu0 0
    %340 = vmatpush1.bf16.msra.mxu0 %v323
    %341 = vmatprep.subr.bf16.mxu0 0
    %342 = vmatpush1.bf16.msra.mxu0 %v324
    %343 = vmatprep.subr.bf16.mxu0 0
    %344 = vmatpush1.bf16.msra.mxu0 0
    %345 = vmatprep.subr.bf16.mxu0 0
    %346 = vmatpush1.bf16.msra.mxu0 0
    %347 = vmatprep.subr.bf16.mxu0 0
    %348 = vmatpush1.bf16.msra.mxu0 0
    %349 = vmatprep.subr.bf16.mxu0 0
    %350 = vmatpush1.bf16.msra.mxu0 0
    %351 = vmatprep.subr.bf16.mxu0 0
    %352 = vmatpush1.bf16.msra.mxu0 0
    %353 = vmatprep.subr.bf16.mxu0 0
    %354 = vmatpush1.bf16.msra.mxu0 0
    %355 = vmatprep.subr.bf16.mxu0 0
    %356 = vmatpush1.bf16.msra.mxu0 0
    %357 = vmatprep.subr.bf16.mxu0 0
    %358 = vmatpush1.bf16.msra.mxu0 0
    %359 = vmatprep.subr.bf16.mxu0 0
    %360 = vmatpush1.bf16.msra.mxu0 0
    %361 = vmatprep.subr.bf16.mxu0 0
    %362 = vmatpush1.bf16.msra.mxu0 0
    %363 = vmatprep.subr.bf16.mxu0 0
    %364 = vmatpush1.bf16.msra.mxu0 0
    %365 = vmatprep.subr.bf16.mxu0 0
    %366 = vmatpush1.bf16.msra.mxu0 0
    %367 = vmatprep.subr.bf16.mxu0 0
    %368 = vmatpush1.bf16.msra.mxu0 0
    %369 = vmatprep.subr.bf16.mxu0 0
    %370 = vmatpush1.bf16.msra.mxu0 0
    %371 = vmatprep.mubr.bf16.mxu0 0
    %372 = vmatmul.mubr.bf16.gmra.mrb[0].mxu0 %v328
    %v373 = vpop.f32.mrb[0].mxu0
    %v374 = vadd.f32 %v293, %v373
    %v375 = vpop.f32.mrb[0].mxu0
    %v376 = vpop.f32.mrb[0].mxu0
    %v377 = vadd.f32 %v293, %v376
    %v378 = vpop.f32.mrb[0].mxu0
    %379 = vmatprep.mubr.bf16.mxu0 0
    %380 = vmatmul.mubr.bf16.gmra.mrb[0].mxu0 %v331
    %v381 = vpop.f32.mrb[0].mxu0
    %v382 = vadd.f32 %v293, %v381
    %v383 = vpop.f32.mrb[0].mxu0
    %v384 = vpop.f32.mrb[0].mxu0
    %v385 = vadd.f32 %v293, %v384
    %v386 = vpop.f32.mrb[0].mxu0
    %387 = vmatprep.mubr.bf16.mxu0 0
    %388 = vmatmul.mubr.bf16.gmra.mrb[0].mxu0 %v334
    %v389 = vpop.f32.mrb[0].mxu0
    %v390 = vadd.f32 %v293, %v389
    %v391 = vpop.f32.mrb[0].mxu0
    %v392 = vpop.f32.mrb[0].mxu0
    %v393 = vadd.f32 %v293, %v392
    %v394 = vpop.f32.mrb[0].mxu0
    %395 = vmatprep.mubr.bf16.mxu0 0
    %396 = vmatmul.mubr.bf16.gmra.mrb[0].mxu0 %v337
    %v397 = vpop.f32.mrb[0].mxu0
    %v398 = vadd.f32 %v293, %v397
    %v399 = vpop.f32.mrb[0].mxu0
    %v400 = vpop.f32.mrb[0].mxu0
    %v401 = vadd.f32 %v293, %v400
    %v402 = vpop.f32.mrb[0].mxu0
    %403 = vdwg.mxu0
    %v404 = vmul.f32 %v374, %v48
    %v405 = vmul.f32 %v377, %v49
    %v406 = vmul.f32 %v382, %v50
    %v407 = vmul.f32 %v385, %v51
    %v408 = vmul.f32 %v390, %v52
    %v409 = vmul.f32 %v393, %v53
    %v410 = vmul.f32 %v398, %v54
    %v411 = vmul.f32 %v401, %v55
    %v412 = vld [vmem:[%s3] sm:$0xff]
    %v413 = vld [vmem:[%s3 + $0x8] sm:$0xff]
    %v415 = vsel %vm86, %v131, 0
    %v418 = vsel %vm86, %v270, 0
    %v421 = vsel %vm86, %v271, 0
    %v424 = vsel %vm86, %v272, 0
    %v427 = vsel %vm86, %v273, 0
    %429 = vmatprep.subr.bf16.mxu0 0
    %430 = vmatpush1.bf16.xpose.msra.mxu0 %v418
    %431 = vmatprep.subr.bf16.mxu0 0
    %432 = vmatpush1.bf16.xpose.msra.mxu0 %v421
    %433 = vmatprep.subr.bf16.mxu0 0
    %434 = vmatpush1.bf16.xpose.msra.mxu0 %v424
    %435 = vmatprep.subr.bf16.mxu0 0
    %436 = vmatpush1.bf16.xpose.msra.mxu0 %v427
    %437 = vmatprep.subr.bf16.mxu0 0
    %438 = vmatpush1.bf16.xpose.msra.mxu0 0
    %439 = vmatprep.subr.bf16.mxu0 0
    %440 = vmatpush1.bf16.xpose.msra.mxu0 0
    %441 = vmatprep.subr.bf16.mxu0 0
    %442 = vmatpush1.bf16.xpose.msra.mxu0 0
    %443 = vmatprep.subr.bf16.mxu0 0
    %444 = vmatpush1.bf16.xpose.msra.mxu0 0
    %445 = vmatprep.subr.bf16.mxu0 0
    %446 = vmatpush1.bf16.xpose.msra.mxu0 0
    %447 = vmatprep.subr.bf16.mxu0 0
    %448 = vmatpush1.bf16.xpose.msra.mxu0 0
    %449 = vmatprep.subr.bf16.mxu0 0
    %450 = vmatpush1.bf16.xpose.msra.mxu0 0
    %451 = vmatprep.subr.bf16.mxu0 0
    %452 = vmatpush1.bf16.xpose.msra.mxu0 0
    %453 = vmatprep.subr.bf16.mxu0 0
    %454 = vmatpush1.bf16.xpose.msra.mxu0 0
    %455 = vmatprep.subr.bf16.mxu0 0
    %456 = vmatpush1.bf16.xpose.msra.mxu0 0
    %457 = vmatprep.subr.bf16.mxu0 0
    %458 = vmatpush1.bf16.xpose.msra.mxu0 0
    %459 = vmatprep.subr.bf16.mxu0 0
    %460 = vmatpush1.bf16.xpose.msra.mxu0 0
    %461 = vmatprep.mubr.bf16.mxu0 0
    %462 = vmatmul.mubr.bf16.gmra.mrb[0].mxu0 %v415
    %v463 = vpop.f32.mrb[0].mxu0
    %v464 = vadd.f32 %v412, %v463
    %v465 = vpop.f32.mrb[0].mxu0
    %v466 = vpop.f32.mrb[0].mxu0
    %v467 = vadd.f32 %v413, %v466
    %v468 = vpop.f32.mrb[0].mxu0
    %469 = vdwg.mxu0
    %vm470 = vcmask 523264
    %v471 = vsel %vm470, %v464, -inf
    %472 = vmax.xlane.f32.xlu0 %v471
    %v473 = vpop.xlane.xlu0 %472
    %v474 = vsel %vm470, %v467, -inf
    %475 = vmax.xlane.f32.xlu0 %v474
    %v476 = vpop.xlane.xlu0 %475
    %v477 = vsub.f32 %v464, %v473
    %v478 = vsub.f32 %v467, %v476
    %v479 = vmul.f32 %v477, 1.442695
    %v480 = vpow.pop %v479
    %v481 = vmul.f32 %v478, 1.442695
    %v482 = vpow.pop %v481
    %v483 = vld [vmem:[%s4] sm:$0xff]
    %v484 = vld [vmem:[%s4 + $0x8] sm:$0xff]
    %v485 = vld [vmem:[%s4 + $0x10] sm:$0xff]
    %v486 = vld [vmem:[%s4 + $0x18] sm:$0xff]
    %v487 = vld [vmem:[%s4 + $0x20] sm:$0xff]
    %v488 = vld [vmem:[%s4 + $0x28] sm:$0xff]
    %v489 = vld [vmem:[%s4 + $0x30] sm:$0xff]
    %v490 = vld [vmem:[%s4 + $0x38] sm:$0xff]
    %v492 = vsel %vm470, %v480, 0
    %v495 = vsel %vm470, %v482, 0
    %497 = vmatprep.subr.mxu0 0.0
    %498 = vmatpush1.msra.mxu0 %v483
    %499 = vmatprep.subr.mxu0 0.0
    %500 = vmatpush1.msra.mxu0 %v484
    %501 = vmatprep.subr.mxu0 0.0
    %502 = vmatpush1.msra.mxu0 %v485
    %503 = vmatprep.subr.mxu0 0.0
    %504 = vmatpush1.msra.mxu0 %v486
    %505 = vmatprep.subr.mxu0 0.0
    %506 = vmatpush1.msra.mxu0 %v487
    %507 = vmatprep.subr.mxu0 0.0
    %508 = vmatpush1.msra.mxu0 %v488
    %509 = vmatprep.subr.mxu0 0.0
    %510 = vmatpush1.msra.mxu0 %v489
    %511 = vmatprep.subr.mxu0 0.0
    %512 = vmatpush1.msra.mxu0 %v490
    %513 = vmatprep.subr.mxu0 0.0
    %514 = vmatpush1.msra.mxu0 0.0
    %515 = vmatprep.subr.mxu0 0.0
    %516 = vmatpush1.msra.mxu0 0.0
    %517 = vmatprep.subr.mxu0 0.0
    %518 = vmatpush1.msra.mxu0 0.0
    %519 = vmatprep.subr.mxu0 0.0
    %520 = vmatpush1.msra.mxu0 0.0
    %521 = vmatprep.subr.mxu0 0.0
    %522 = vmatpush1.msra.mxu0 0.0
    %523 = vmatprep.subr.mxu0 0.0
    %524 = vmatpush1.msra.mxu0 0.0
    %525 = vmatprep.subr.mxu0 0.0
    %526 = vmatpush1.msra.mxu0 0.0
    %527 = vmatprep.subr.mxu0 0.0
    %528 = vmatpush1.msra.mxu0 0.0
    %529 = vmatprep.subr.mxu0 0.0
    %530 = vmatpush1.msra.mxu0 0.0
    %531 = vmatprep.subr.mxu0 0.0
    %532 = vmatpush1.msra.mxu0 0.0
    %533 = vmatprep.subr.mxu0 0.0
    %534 = vmatpush1.msra.mxu0 0.0
    %535 = vmatprep.subr.mxu0 0.0
    %536 = vmatpush1.msra.mxu0 0.0
    %537 = vmatprep.subr.mxu0 0.0
    %538 = vmatpush1.msra.mxu0 0.0
    %539 = vmatprep.subr.mxu0 0.0
    %540 = vmatpush1.msra.mxu0 0.0
    %541 = vmatprep.subr.mxu0 0.0
    %542 = vmatpush1.msra.mxu0 0.0
    %543 = vmatprep.subr.mxu0 0.0
    %544 = vmatpush1.msra.mxu0 0.0
    %545 = vmatprep.subr.mxu0 0.0
    %546 = vmatpush1.msra.mxu0 0.0
    %547 = vmatprep.subr.mxu0 0.0
    %548 = vmatpush1.msra.mxu0 0.0
    %549 = vmatprep.subr.mxu0 0.0
    %550 = vmatpush1.msra.mxu0 0.0
    %551 = vmatprep.subr.mxu0 0.0
    %552 = vmatpush1.msra.mxu0 0.0
    %553 = vmatprep.subr.mxu0 0.0
    %554 = vmatpush1.msra.mxu0 0.0
    %555 = vmatprep.subr.mxu0 0.0
    %556 = vmatpush1.msra.mxu0 0.0
    %557 = vmatprep.subr.mxu0 0.0
    %558 = vmatpush1.msra.mxu0 0.0
    %559 = vmatprep.subr.mxu0 0.0
    %560 = vmatpush1.msra.mxu0 0.0
    %561 = vmatprep.mubr.f32.mxu0 0.0
    %562 = vmatmul.mubr.f32.gmra.mrb[0].mxu0 %v492
    %v563 = vpop.f32.mrb[0].mxu0
    %v564 = vadd.f32 0.0, %v563
    %v565 = vpop.f32.mrb[0].mxu0
    %566 = vmatprep.mubr.f32.mxu0 0.0
    %567 = vmatmul.mubr.f32.gmra.mrb[0].mxu0 %v495
    %v568 = vpop.f32.mrb[0].mxu0
    %v569 = vadd.f32 0.0, %v568
    %v570 = vpop.f32.mrb[0].mxu0
    %571 = vdwg.mxu0
    %v572 = vrcp.pop %v564
    %v573 = vrcp.pop %v569
    %v574 = vmul.f32 %v480, %v572
    %v575 = vmul.f32 %v482, %v573
    %v576 = vpack.c.bf16 %v575, %v574
    %v577 = vpack.c.bf16 %v405, %v404
    %v578 = vpack.c.bf16 %v407, %v406
    %v579 = vpack.c.bf16 %v409, %v408
    %v580 = vpack.c.bf16 %v411, %v410
    %v581 = vld [vmem:[%s7] sm:$0xf]
    %v582 = vld [vmem:[%s7 + $0x4] sm:$0xf]
    %v583 = vld [vmem:[%s7 + $0x8] sm:$0xf]
    %v584 = vld [vmem:[%s7 + $0xc] sm:$0xf]
    %v589 = vunpack.c.l.b16 %v581
    %v590 = vunpack.c.l.b16 %v582
    %v591 = vunpack.c.l.b16 %v583
    %v592 = vunpack.c.l.b16 %v584
    %v593 = vpack.c.b16 %v590, %v589
    %v594 = vpack.c.b16 %v592, %v591
    %v598 = vsel %vm86, %v577, 0
    %v601 = vsel %vm86, %v578, 0
    %v604 = vsel %vm86, %v579, 0
    %v607 = vsel %vm86, %v580, 0
    %609 = vmatprep.subr.bf16.mxu0 0
    %610 = vmatpush1.bf16.msra.mxu0 %v593
    %611 = vmatprep.subr.bf16.mxu0 0
    %612 = vmatpush1.bf16.msra.mxu0 %v594
    %613 = vmatprep.subr.bf16.mxu0 0
    %614 = vmatpush1.bf16.msra.mxu0 0
    %615 = vmatprep.subr.bf16.mxu0 0
    %616 = vmatpush1.bf16.msra.mxu0 0
    %617 = vmatprep.subr.bf16.mxu0 0
    %618 = vmatpush1.bf16.msra.mxu0 0
    %619 = vmatprep.subr.bf16.mxu0 0
    %620 = vmatpush1.bf16.msra.mxu0 0
    %621 = vmatprep.subr.bf16.mxu0 0
    %622 = vmatpush1.bf16.msra.mxu0 0
    %623 = vmatprep.subr.bf16.mxu0 0
    %624 = vmatpush1.bf16.msra.mxu0 0
    %625 = vmatprep.subr.bf16.mxu0 0
    %626 = vmatpush1.bf16.msra.mxu0 0
    %627 = vmatprep.subr.bf16.mxu0 0
    %628 = vmatpush1.bf16.msra.mxu0 0
    %629 = vmatprep.subr.bf16.mxu0 0
    %630 = vmatpush1.bf16.msra.mxu0 0
    %631 = vmatprep.subr.bf16.mxu0 0
    %632 = vmatpush1.bf16.msra.mxu0 0
    %633 = vmatprep.subr.bf16.mxu0 0
    %634 = vmatpush1.bf16.msra.mxu0 0
    %635 = vmatprep.subr.bf16.mxu0 0
    %636 = vmatpush1.bf16.msra.mxu0 0
    %637 = vmatprep.subr.bf16.mxu0 0
    %638 = vmatpush1.bf16.msra.mxu0 0
    %639 = vmatprep.subr.bf16.mxu0 0
    %640 = vmatpush1.bf16.msra.mxu0 0
    %641 = vmatprep.mubr.bf16.mxu0 0
    %642 = vmatmul.mubr.bf16.gmra.mrb[0].mxu0 %v598
    %v643 = vpop.f32.mrb[0].mxu0
    %v644 = vadd.f32 0.0, %v643
    %v645 = vpop.f32.mrb[0].mxu0
    %v646 = vpop.f32.mrb[0].mxu0
    %v647 = vadd.f32 0.0, %v646
    %v648 = vpop.f32.mrb[0].mxu0
    %649 = vmatprep.mubr.bf16.mxu0 0
    %650 = vmatmul.mubr.bf16.gmra.mrb[0].mxu0 %v601
    %v651 = vpop.f32.mrb[0].mxu0
    %v652 = vadd.f32 0.0, %v651
    %v653 = vpop.f32.mrb[0].mxu0
    %v654 = vpop.f32.mrb[0].mxu0
    %v655 = vadd.f32 0.0, %v654
    %v656 = vpop.f32.mrb[0].mxu0
    %657 = vmatprep.mubr.bf16.mxu0 0
    %658 = vmatmul.mubr.bf16.gmra.mrb[0].mxu0 %v604
    %v659 = vpop.f32.mrb[0].mxu0
    %v660 = vadd.f32 0.0, %v659
    %v661 = vpop.f32.mrb[0].mxu0
    %v662 = vpop.f32.mrb[0].mxu0
    %v663 = vadd.f32 0.0, %v662
    %v664 = vpop.f32.mrb[0].mxu0
    %665 = vmatprep.mubr.bf16.mxu0 0
    %666 = vmatmul.mubr.bf16.gmra.mrb[0].mxu0 %v607
    %v667 = vpop.f32.mrb[0].mxu0
    %v668 = vadd.f32 0.0, %v667
    %v669 = vpop.f32.mrb[0].mxu0
    %v670 = vpop.f32.mrb[0].mxu0
    %v671 = vadd.f32 0.0, %v670
    %v672 = vpop.f32.mrb[0].mxu0
    %673 = vdwg.mxu0
    %v674 = vpack.c.bf16 %v647, %v644
    %v675 = vpack.c.bf16 %v655, %v652
    %v676 = vpack.c.bf16 %v663, %v660
    %v677 = vpack.c.bf16 %v671, %v668
    %s678 = scalar_lea.vmem %s8, 3
    %v679 = vld [vmem:[%s678] sm:$0x1]
    %v681 = vlaneseq
    %v682 = vshrl.u32 %v681, 7
    %v683 = vsub.s32 0, %v682
    %v684 = vrot.slane %v679, %v683
    %v687 = vsel %vm470, %v576, 0
    %689 = vmatprep.subr.bf16.mxu0 0
    %690 = vmatpush1.bf16.msra.mxu0 %v674
    %691 = vmatprep.subr.bf16.mxu0 0
    %692 = vmatpush1.bf16.msra.mxu0 %v675
    %693 = vmatprep.subr.bf16.mxu0 0
    %694 = vmatpush1.bf16.msra.mxu0 %v676
    %695 = vmatprep.subr.bf16.mxu0 0
    %696 = vmatpush1.bf16.msra.mxu0 %v677
    %697 = vmatprep.subr.bf16.mxu0 0
    %698 = vmatpush1.bf16.msra.mxu0 0
    %699 = vmatprep.subr.bf16.mxu0 0
    %700 = vmatpush1.bf16.msra.mxu0 0
    %701 = vmatprep.subr.bf16.mxu0 0
    %702 = vmatpush1.bf16.msra.mxu0 0
    %703 = vmatprep.subr.bf16.mxu0 0
    %704 = vmatpush1.bf16.msra.mxu0 0
    %705 = vmatprep.subr.bf16.mxu0 0
    %706 = vmatpush1.bf16.msra.mxu0 0
    %707 = vmatprep.subr.bf16.mxu0 0
    %708 = vmatpush1.bf16.msra.mxu0 0
    %709 = vmatprep.subr.bf16.mxu0 0
    %710 = vmatpush1.bf16.msra.mxu0 0
    %711 = vmatprep.subr.bf16.mxu0 0
    %712 = vmatpush1.bf16.msra.mxu0 0
    %713 = vmatprep.subr.bf16.mxu0 0
    %714 = vmatpush1.bf16.msra.mxu0 0
    %715 = vmatprep.subr.bf16.mxu0 0
    %716 = vmatpush1.bf16.msra.mxu0 0
    %717 = vmatprep.subr.bf16.mxu0 0
    %718 = vmatpush1.bf16.msra.mxu0 0
    %719 = vmatprep.subr.bf16.mxu0 0
    %720 = vmatpush1.bf16.msra.mxu0 0
    %721 = vmatprep.mubr.bf16.mxu0 0
    %722 = vmatmul.mubr.bf16.gmra.mrb[0].mxu0 %v687
    %v723 = vpop.f32.mrb[0].mxu0
    %v724 = vadd.f32 %v684, %v723
    %v725 = vpop.f32.mrb[0].mxu0
    %v726 = vpop.f32.mrb[0].mxu0
    %v727 = vadd.f32 %v684, %v726
    %v728 = vpop.f32.mrb[0].mxu0
    %729 = vdwg.mxu0
    %730 = vst.msk [vmem:[#allocation5] sm:$0xff] %vm86, %v724
    %731 = vst.msk [vmem:[#allocation5 + $0x8] sm:$0xff] %vm86, %v727
    // Predicated region
    $region42: #{tpu_custom_call.1} parent=1 // pred_check
      _
    $region43: #{tpu_custom_call.1} parent=1 // pred_check_branch
      %733 = sbr.rel (0) target = $region45
    $region44: #{tpu_custom_call.1} parent=1 // pred_region
      %s735 = ssub.s32 256, 256
      %736 = vsyncadd [#allocation4], %s735
      %s737 = sshll.u32 [#allocation5], 4
      %s738 = int_to_ptr.vmem [resolvable:$true] %s737
      %743 = dma.vmem_to_hbm [thread:$0]  %s738, 256, %s9, [#allocation4], 128, 128, 8
    $region45: #{tpu_custom_call.1} parent=1 // pred_fallthru
      _
    // Predicated region
    $region46: #{tpu_custom_call.1} parent=1 // pred_check
      _
    $region47: #{tpu_custom_call.1} parent=1 // pred_check_branch
      %745 = sbr.rel (0) target = $region49
    $region48: #{tpu_custom_call.1} parent=1 // pred_region
      %746 = dma.done [#allocation4], 256
    $region49: #{tpu_custom_call.1} parent=1 // pred_fallthru
      _
    %747 = vsyncpa [#allocation3], 1
    %748 = vsyncpa [#allocation4], 1

</llo_original>
